<compile_context>
chip_gen: v5e
topology: v5e:2x2
jax: 0.10.0
libtpu: 0.0.40
codegen_flags: <defaults>
</compile_context>

<pallas_src>
import functools

import jax
import jax.numpy as jnp
from jax.experimental import pallas as pl
from jax.experimental.pallas import tpu as pltpu


def _round_up(x, m):
    return pl.cdiv(x, m) * m


# ----------------------------------------------------------------------------
# Pallas kernel: whole LICA mixing-critic forward for one batch tile.
# All activations are laid out (feature, batch) => batch on lanes.
# ----------------------------------------------------------------------------
def _lica_kernel(act_ref, st_ref,
                 wcat_ref, bcat_ref,        # fused first layers of all 4 hypernets
                 w1b_ref, b1b_ref,          # hyper_w1 layer 2  (embed, H) / (embed, 1)
                 w2b_ref, b2b_ref,          # hyper_w2 layer 2  (H, H) / (H, 1)
                 wb2b_ref, bb2b_ref,        # hyper_b2 layer 2  (H, 1) / (1, 1)
                 q_ref,
                 *, num_mix_inputs, hidden_dim):
    f32 = jnp.float32
    H = hidden_dim
    st = st_ref[...]                      # (state_dim, TB)
    act = act_ref[...]                    # (naa, TB)

    # ---- single fused first-layer matmul for all 4 state-fed hypernets ----
    # (4H, state_dim) @ (state_dim, TB) -> (4H, TB)
    z = jnp.dot(wcat_ref[...], st, preferred_element_type=f32) + bcat_ref[...]
    h1 = jnp.maximum(z[0 * H:1 * H, :], 0.0)   # hyper_w1 layer-1 (post ReLU)
    b1 = z[1 * H:2 * H, :]                     # hyper_b1 (single linear, no ReLU)
    g = jnp.maximum(z[2 * H:3 * H, :], 0.0)    # hyper_w2 layer-1
    gb = jnp.maximum(z[3 * H:4 * H, :], 0.0)   # hyper_b2 layer-1

    # ---- hyper_w1 layer-2: w1 = W1b^T @ h1 + b1b  -> (naa*H, TB) ----
    w1 = jnp.dot(w1b_ref[...], h1, preferred_element_type=f32) + b1b_ref[...]

    # ---- h = relu(bmm(action_probs, w1) + b1) ----
    # per-column weighted sum of sublane-aligned H-row chunks (H % 8 == 0).
    h = b1
    for k in range(num_mix_inputs):            # naa is small; static unroll
        h = h + act[k:k + 1, :] * w1[k * H:(k + 1) * H, :]
    h = jnp.maximum(h, 0.0)                    # (H, TB)

    # ---- hyper_w2 layer-2: w_final = W2b^T @ g + b2b -> (H, TB) ----
    w_final = jnp.dot(w2b_ref[...], g, preferred_element_type=f32) + b2b_ref[...]

    # ---- h2 = bmm(h, w_final): per-column dot product (sublane reduce) ----
    h2 = jnp.sum(h * w_final, axis=0, keepdims=True)          # (1, TB)

    # ---- hyper_b2 layer-2 as a VPU dot (avoids an N=1 MXU matmul) ----
    b2 = jnp.sum(gb * wb2b_ref[...], axis=0, keepdims=True) + bb2b_ref[...]

    q_ref[...] = (h2 + b2).astype(q_ref.dtype)                 # (1, TB) lane-dense


# ----------------------------------------------------------------------------
# Wrapper
# ----------------------------------------------------------------------------
def lica_critic_forward(actions, states, params, *, obs_input_dim,
                        mixing_embed_dim, num_actions, num_agents,
                        block_b=1024):
    state_dim = obs_input_dim * num_agents
    naa = num_agents * num_actions
    H = mixing_embed_dim
    embed = naa * H

    bs = states.shape[0]
    st = states.reshape(-1, state_dim).astype(jnp.float32)
    act = actions.reshape(-1, naa).astype(jnp.float32)
    B = st.shape[0]

    # Batch tile: multiple of 128 lanes, no bigger than needed; pad batch.
    bb = int(max(128, min(int(block_b), _round_up(B, 128))))
    bb = int(_round_up(bb, 128))
    B_pad = int(_round_up(B, bb))
    grid = B_pad // bb

    # Transpose to (feature, batch) and zero-pad the batch (lane) axis.
    st_t = jnp.pad(st.T, ((0, 0), (0, B_pad - B)))
    act_t = jnp.pad(act.T, ((0, 0), (0, B_pad - B)))

    # Pack the four state-fed first-layer hypernet weights into one matmul.
    wcat = jnp.concatenate(
        [params["w1a"].T, params["wb1"].T, params["w2a"].T, params["wb2a"].T],
        axis=0).astype(jnp.float32)                             # (4H, state_dim)
    bcat = jnp.concatenate(
        [params["b1a"], params["bb1"], params["b2a"], params["bb2a"]],
        axis=1).T.astype(jnp.float32)                           # (4H, 1)
    weight_arrays = [
        wcat, bcat,
        params["w1b"].T.astype(jnp.float32),    # (embed, H)
        params["b1b"].T.astype(jnp.float32),    # (embed, 1)
        params["w2b"].T.astype(jnp.float32),    # (H, H)
        params["b2b"].T.astype(jnp.float32),    # (H, 1)
        params["wb2b"].astype(jnp.float32),     # (H, 1)
        params["bb2b"].reshape(1, 1).astype(jnp.float32),       # (1, 1)
    ]

    in_specs = [
        pl.BlockSpec((naa, bb), lambda i: (0, i)),         # actions^T
        pl.BlockSpec((state_dim, bb), lambda i: (0, i)),   # states^T
    ] + [pl.BlockSpec(w.shape, lambda i: (0, 0)) for w in weight_arrays]

    flops_per_row = (2 * (4 * H * state_dim + embed * H + H * H)
                     + 4 * naa * H + 6 * H)
    cost = pl.CostEstimate(
        flops=int(B_pad * flops_per_row),
        transcendentals=0,
        bytes_accessed=int(4 * (B_pad * (state_dim + naa + 1)
                                + sum(int(w.size) for w in weight_arrays))),
    )

    kernel = functools.partial(_lica_kernel, num_mix_inputs=naa, hidden_dim=H)

    q_t = pl.pallas_call(
        kernel,
        out_shape=jax.ShapeDtypeStruct((1, B_pad), jnp.float32),
        grid_spec=pltpu.PrefetchScalarGridSpec(
            num_scalar_prefetch=0,
            grid=(grid,),
            in_specs=in_specs,
            out_specs=pl.BlockSpec((1, bb), lambda i: (0, i)),
        ),
        compiler_params=pltpu.CompilerParams(
            dimension_semantics=("parallel",)),
        cost_estimate=cost,
    )(act_t, st_t, *weight_arrays)

    return q_t[0, :B].reshape(bs, -1, 1)


# ----------------------------------------------------------------------------
# Parameter init (deterministic, PyTorch nn.Linear-style uniform) + reference
# ----------------------------------------------------------------------------
def _init_linear(key, fan_in, fan_out):
    kw, kb = jax.random.split(key)
    bound = 1.0 / float(fan_in) ** 0.5
    w = jax.random.uniform(kw, (fan_in, fan_out), jnp.float32, -bound, bound)
    b = jax.random.uniform(kb, (1, fan_out), jnp.float32, -bound, bound)
    return w, b


def make_params(key, obs_input_dim, mixing_embed_dim, num_actions, num_agents):
    state_dim = obs_input_dim * num_agents
    embed_dim = num_actions * num_agents * mixing_embed_dim
    hidden = mixing_embed_dim
    keys = jax.random.split(key, 7)
    p = {}
    p["w1a"], p["b1a"] = _init_linear(keys[0], state_dim, hidden)
    p["w1b"], p["b1b"] = _init_linear(keys[1], hidden, embed_dim)
    p["wb1"], p["bb1"] = _init_linear(keys[2], state_dim, hidden)
    p["w2a"], p["b2a"] = _init_linear(keys[3], state_dim, hidden)
    p["w2b"], p["b2b"] = _init_linear(keys[4], hidden, hidden)
    p["wb2a"], p["bb2a"] = _init_linear(keys[5], state_dim, hidden)
    p["wb2b"], p["bb2b"] = _init_linear(keys[6], hidden, 1)
    return p


def lica_critic_reference(actions, states, p, *, obs_input_dim,
                          mixing_embed_dim, num_actions, num_agents):
    state_dim = obs_input_dim * num_agents
    naa = num_agents * num_actions
    hidden = mixing_embed_dim
    bs = states.shape[0]
    st = states.reshape(-1, state_dim)
    act = actions.reshape(-1, 1, naa)

    w1 = jnp.maximum(st @ p["w1a"] + p["b1a"], 0.0) @ p["w1b"] + p["b1b"]
    b1 = st @ p["wb1"] + p["bb1"]
    w1 = w1.reshape(-1, naa, hidden)
    b1 = b1.reshape(-1, 1, hidden)
    h = jnp.maximum(jnp.einsum("bik,bkh->bih", act, w1) + b1, 0.0)

    wf = jnp.maximum(st @ p["w2a"] + p["b2a"], 0.0) @ p["w2b"] + p["b2b"]
    wf = wf.reshape(-1, hidden, 1)
    h2 = jnp.einsum("bih,bho->bio", h, wf)

    b2 = jnp.maximum(st @ p["wb2a"] + p["bb2a"], 0.0) @ p["wb2b"] + p["bb2b"]
    q = h2 + b2.reshape(-1, 1, 1)
    return q.reshape(bs, -1, 1)


# ----------------------------------------------------------------------------
if __name__ == "__main__":
    # LICACritic(obs_input_dim=16, mixing_embed_dim=32, num_actions=4,
    #            num_agents=3, num_hypernet_layers=2)
    obs_input_dim = 16
    mixing_embed_dim = 32
    num_actions = 4
    num_agents = 3

    cfg = dict(obs_input_dim=obs_input_dim, mixing_embed_dim=mixing_embed_dim,
               num_actions=num_actions, num_agents=num_agents)

    key = jax.random.PRNGKey(0)
    k_params, k_act, k_st, k_act2, k_st2 = jax.random.split(key, 5)
    params = make_params(k_params, obs_input_dim, mixing_embed_dim,
                         num_actions, num_agents)

    # --- small batch (pads up to one 128-lane tile) ---
    bs = 8
    actions = jax.nn.softmax(
        jax.random.normal(k_act, (bs, num_agents, num_actions), jnp.float32),
        axis=-1)
    states = jax.random.normal(k_st, (bs, num_agents, obs_input_dim),
                               jnp.float32)
    q = jax.block_until_ready(lica_critic_forward(actions, states, params, **cfg))
    q_ref = lica_critic_reference(actions, states, params, **cfg)
    assert q.shape == (bs, 1, 1), q.shape
    assert jnp.allclose(q, q_ref, atol=1e-4, rtol=1e-4), (
        float(jnp.max(jnp.abs(q - q_ref))))

    # --- larger, non-tile-multiple batch: exercises multi-tile grid + padding ---
    bs2 = 1000
    actions2 = jax.nn.softmax(
        jax.random.normal(k_act2, (bs2, num_agents, num_actions), jnp.float32),
        axis=-1)
    states2 = jax.random.normal(k_st2, (bs2, num_agents, obs_input_dim),
                                jnp.float32)
    q2 = jax.block_until_ready(
        lica_critic_forward(actions2, states2, params, block_b=256, **cfg))
    q2_ref = lica_critic_reference(actions2, states2, params, **cfg)
    assert q2.shape == (bs2, 1, 1), q2.shape
    assert jnp.allclose(q2, q2_ref, atol=1e-4, rtol=1e-4), (
        float(jnp.max(jnp.abs(q2 - q2_ref))))

    print("KERNEL_OK")
</pallas_src>

<mosaic_0001>
module attributes {stable_mosaic.version = 11 : i64} {
  func.func @_lica_kernel(%arg0: i32, %arg1: memref<12x128xf32, #tpu.memory_space<vmem>>, %arg2: memref<48x128xf32, #tpu.memory_space<vmem>>, %arg3: memref<128x48xf32, #tpu.memory_space<vmem>>, %arg4: memref<128x1xf32, #tpu.memory_space<vmem>>, %arg5: memref<384x32xf32, #tpu.memory_space<vmem>>, %arg6: memref<384x1xf32, #tpu.memory_space<vmem>>, %arg7: memref<32x32xf32, #tpu.memory_space<vmem>>, %arg8: memref<32x1xf32, #tpu.memory_space<vmem>>, %arg9: memref<32x1xf32, #tpu.memory_space<vmem>>, %arg10: memref<1x1xf32, #tpu.memory_space<vmem>>, %arg11: memref<1x128xf32, #tpu.memory_space<vmem>>) attributes {dimension_semantics = [#tpu.dimension_semantics<parallel>], iteration_bounds = array<i64: 1>, scalar_prefetch = 0 : i64, scratch_operands = 0 : i64, tpu.core_type = #tpu.core_type<tc>, window_params = [{transform_indices = @transform_0, window_bounds = array<i64: 12, 128>}, {transform_indices = @transform_1, window_bounds = array<i64: 48, 128>}, {pipeline_mode = #tpu.pipeline_mode<synchronous>, transform_indices = @transform_2, window_bounds = array<i64: 128, 48>}, {pipeline_mode = #tpu.pipeline_mode<synchronous>, transform_indices = @transform_3, window_bounds = array<i64: 128, 1>}, {pipeline_mode = #tpu.pipeline_mode<synchronous>, transform_indices = @transform_4, window_bounds = array<i64: 384, 32>}, {pipeline_mode = #tpu.pipeline_mode<synchronous>, transform_indices = @transform_5, window_bounds = array<i64: 384, 1>}, {pipeline_mode = #tpu.pipeline_mode<synchronous>, transform_indices = @transform_6, window_bounds = array<i64: 32, 32>}, {pipeline_mode = #tpu.pipeline_mode<synchronous>, transform_indices = @transform_7, window_bounds = array<i64: 32, 1>}, {pipeline_mode = #tpu.pipeline_mode<synchronous>, transform_indices = @transform_8, window_bounds = array<i64: 32, 1>}, {pipeline_mode = #tpu.pipeline_mode<synchronous>, transform_indices = @transform_9, window_bounds = array<i64: 1, 1>}, {transform_indices = @transform_10, window_bounds = array<i64: 1, 128>}]} {
    %c0 = arith.constant 0 : index
    %c0_0 = arith.constant 0 : index
    %0 = vector.load %arg2[%c0, %c0_0] : memref<48x128xf32, #tpu.memory_space<vmem>>, vector<48x128xf32>
    %c0_1 = arith.constant 0 : index
    %c0_2 = arith.constant 0 : index
    %1 = vector.load %arg1[%c0_1, %c0_2] : memref<12x128xf32, #tpu.memory_space<vmem>>, vector<12x128xf32>
    %c0_3 = arith.constant 0 : index
    %c0_4 = arith.constant 0 : index
    %2 = vector.load %arg3[%c0_3, %c0_4] : memref<128x48xf32, #tpu.memory_space<vmem>>, vector<128x48xf32>
    %cst = arith.constant dense<0.000000e+00> : vector<128x128xf32>
    %3 = tpu.matmul %2, %0, %cst {dimension_numbers = #tpu.dot_dimension_numbers<[1], [0], [0], [1], [0, 0, 1, 1], [], []>} : vector<128x48xf32>, vector<48x128xf32>, vector<128x128xf32> -> vector<128x128xf32>
    %c0_5 = arith.constant 0 : index
    %c0_6 = arith.constant 0 : index
    %4 = vector.load %arg4[%c0_5, %c0_6] : memref<128x1xf32, #tpu.memory_space<vmem>>, vector<128x1xf32>
    %5 = vector.broadcast %4 : vector<128x1xf32> to vector<128x128xf32>
    %6 = arith.addf %3, %5 : vector<128x128xf32>
    %7 = vector.extract_strided_slice %6 {offsets = [0, 0], sizes = [32, 128], strides = [1, 1]} : vector<128x128xf32> to vector<32x128xf32>
    %cst_7 = arith.constant 0.000000e+00 : f32
    %8 = vector.broadcast %cst_7 : f32 to vector<32x128xf32>
    %9 = arith.maximumf %7, %8 : vector<32x128xf32>
    %10 = vector.extract_strided_slice %6 {offsets = [32, 0], sizes = [32, 128], strides = [1, 1]} : vector<128x128xf32> to vector<32x128xf32>
    %11 = vector.extract_strided_slice %6 {offsets = [64, 0], sizes = [32, 128], strides = [1, 1]} : vector<128x128xf32> to vector<32x128xf32>
    %cst_8 = arith.constant 0.000000e+00 : f32
    %12 = vector.broadcast %cst_8 : f32 to vector<32x128xf32>
    %13 = arith.maximumf %11, %12 : vector<32x128xf32>
    %14 = vector.extract_strided_slice %6 {offsets = [96, 0], sizes = [32, 128], strides = [1, 1]} : vector<128x128xf32> to vector<32x128xf32>
    %cst_9 = arith.constant 0.000000e+00 : f32
    %15 = vector.broadcast %cst_9 : f32 to vector<32x128xf32>
    %16 = arith.maximumf %14, %15 : vector<32x128xf32>
    %c0_10 = arith.constant 0 : index
    %c0_11 = arith.constant 0 : index
    %17 = vector.load %arg5[%c0_10, %c0_11] : memref<384x32xf32, #tpu.memory_space<vmem>>, vector<384x32xf32>
    %cst_12 = arith.constant dense<0.000000e+00> : vector<384x128xf32>
    %18 = tpu.matmul %17, %9, %cst_12 {dimension_numbers = #tpu.dot_dimension_numbers<[1], [0], [0], [1], [0, 0, 1, 1], [], []>} : vector<384x32xf32>, vector<32x128xf32>, vector<384x128xf32> -> vector<384x128xf32>
    %c0_13 = arith.constant 0 : index
    %c0_14 = arith.constant 0 : index
    %19 = vector.load %arg6[%c0_13, %c0_14] : memref<384x1xf32, #tpu.memory_space<vmem>>, vector<384x1xf32>
    %20 = vector.broadcast %19 : vector<384x1xf32> to vector<384x128xf32>
    %21 = arith.addf %18, %20 : vector<384x128xf32>
    %22 = vector.extract_strided_slice %1 {offsets = [0, 0], sizes = [1, 128], strides = [1, 1]} : vector<12x128xf32> to vector<1x128xf32>
    %23 = vector.extract_strided_slice %21 {offsets = [0, 0], sizes = [32, 128], strides = [1, 1]} : vector<384x128xf32> to vector<32x128xf32>
    %24 = vector.broadcast %22 : vector<1x128xf32> to vector<32x128xf32>
    %25 = arith.mulf %24, %23 : vector<32x128xf32>
    %26 = arith.addf %10, %25 : vector<32x128xf32>
    %27 = vector.extract_strided_slice %1 {offsets = [1, 0], sizes = [1, 128], strides = [1, 1]} : vector<12x128xf32> to vector<1x128xf32>
    %28 = vector.extract_strided_slice %21 {offsets = [32, 0], sizes = [32, 128], strides = [1, 1]} : vector<384x128xf32> to vector<32x128xf32>
    %29 = vector.broadcast %27 : vector<1x128xf32> to vector<32x128xf32>
    %30 = arith.mulf %29, %28 : vector<32x128xf32>
    %31 = arith.addf %26, %30 : vector<32x128xf32>
    %32 = vector.extract_strided_slice %1 {offsets = [2, 0], sizes = [1, 128], strides = [1, 1]} : vector<12x128xf32> to vector<1x128xf32>
    %33 = vector.extract_strided_slice %21 {offsets = [64, 0], sizes = [32, 128], strides = [1, 1]} : vector<384x128xf32> to vector<32x128xf32>
    %34 = vector.broadcast %32 : vector<1x128xf32> to vector<32x128xf32>
    %35 = arith.mulf %34, %33 : vector<32x128xf32>
    %36 = arith.addf %31, %35 : vector<32x128xf32>
    %37 = vector.extract_strided_slice %1 {offsets = [3, 0], sizes = [1, 128], strides = [1, 1]} : vector<12x128xf32> to vector<1x128xf32>
    %38 = vector.extract_strided_slice %21 {offsets = [96, 0], sizes = [32, 128], strides = [1, 1]} : vector<384x128xf32> to vector<32x128xf32>
    %39 = vector.broadcast %37 : vector<1x128xf32> to vector<32x128xf32>
    %40 = arith.mulf %39, %38 : vector<32x128xf32>
    %41 = arith.addf %36, %40 : vector<32x128xf32>
    %42 = vector.extract_strided_slice %1 {offsets = [4, 0], sizes = [1, 128], strides = [1, 1]} : vector<12x128xf32> to vector<1x128xf32>
    %43 = vector.extract_strided_slice %21 {offsets = [128, 0], sizes = [32, 128], strides = [1, 1]} : vector<384x128xf32> to vector<32x128xf32>
    %44 = vector.broadcast %42 : vector<1x128xf32> to vector<32x128xf32>
    %45 = arith.mulf %44, %43 : vector<32x128xf32>
    %46 = arith.addf %41, %45 : vector<32x128xf32>
    %47 = vector.extract_strided_slice %1 {offsets = [5, 0], sizes = [1, 128], strides = [1, 1]} : vector<12x128xf32> to vector<1x128xf32>
    %48 = vector.extract_strided_slice %21 {offsets = [160, 0], sizes = [32, 128], strides = [1, 1]} : vector<384x128xf32> to vector<32x128xf32>
    %49 = vector.broadcast %47 : vector<1x128xf32> to vector<32x128xf32>
    %50 = arith.mulf %49, %48 : vector<32x128xf32>
    %51 = arith.addf %46, %50 : vector<32x128xf32>
    %52 = vector.extract_strided_slice %1 {offsets = [6, 0], sizes = [1, 128], strides = [1, 1]} : vector<12x128xf32> to vector<1x128xf32>
    %53 = vector.extract_strided_slice %21 {offsets = [192, 0], sizes = [32, 128], strides = [1, 1]} : vector<384x128xf32> to vector<32x128xf32>
    %54 = vector.broadcast %52 : vector<1x128xf32> to vector<32x128xf32>
    %55 = arith.mulf %54, %53 : vector<32x128xf32>
    %56 = arith.addf %51, %55 : vector<32x128xf32>
    %57 = vector.extract_strided_slice %1 {offsets = [7, 0], sizes = [1, 128], strides = [1, 1]} : vector<12x128xf32> to vector<1x128xf32>
    %58 = vector.extract_strided_slice %21 {offsets = [224, 0], sizes = [32, 128], strides = [1, 1]} : vector<384x128xf32> to vector<32x128xf32>
    %59 = vector.broadcast %57 : vector<1x128xf32> to vector<32x128xf32>
    %60 = arith.mulf %59, %58 : vector<32x128xf32>
    %61 = arith.addf %56, %60 : vector<32x128xf32>
    %62 = vector.extract_strided_slice %1 {offsets = [8, 0], sizes = [1, 128], strides = [1, 1]} : vector<12x128xf32> to vector<1x128xf32>
    %63 = vector.extract_strided_slice %21 {offsets = [256, 0], sizes = [32, 128], strides = [1, 1]} : vector<384x128xf32> to vector<32x128xf32>
    %64 = vector.broadcast %62 : vector<1x128xf32> to vector<32x128xf32>
    %65 = arith.mulf %64, %63 : vector<32x128xf32>
    %66 = arith.addf %61, %65 : vector<32x128xf32>
    %67 = vector.extract_strided_slice %1 {offsets = [9, 0], sizes = [1, 128], strides = [1, 1]} : vector<12x128xf32> to vector<1x128xf32>
    %68 = vector.extract_strided_slice %21 {offsets = [288, 0], sizes = [32, 128], strides = [1, 1]} : vector<384x128xf32> to vector<32x128xf32>
    %69 = vector.broadcast %67 : vector<1x128xf32> to vector<32x128xf32>
    %70 = arith.mulf %69, %68 : vector<32x128xf32>
    %71 = arith.addf %66, %70 : vector<32x128xf32>
    %72 = vector.extract_strided_slice %1 {offsets = [10, 0], sizes = [1, 128], strides = [1, 1]} : vector<12x128xf32> to vector<1x128xf32>
    %73 = vector.extract_strided_slice %21 {offsets = [320, 0], sizes = [32, 128], strides = [1, 1]} : vector<384x128xf32> to vector<32x128xf32>
    %74 = vector.broadcast %72 : vector<1x128xf32> to vector<32x128xf32>
    %75 = arith.mulf %74, %73 : vector<32x128xf32>
    %76 = arith.addf %71, %75 : vector<32x128xf32>
    %77 = vector.extract_strided_slice %1 {offsets = [11, 0], sizes = [1, 128], strides = [1, 1]} : vector<12x128xf32> to vector<1x128xf32>
    %78 = vector.extract_strided_slice %21 {offsets = [352, 0], sizes = [32, 128], strides = [1, 1]} : vector<384x128xf32> to vector<32x128xf32>
    %79 = vector.broadcast %77 : vector<1x128xf32> to vector<32x128xf32>
    %80 = arith.mulf %79, %78 : vector<32x128xf32>
    %81 = arith.addf %76, %80 : vector<32x128xf32>
    %cst_15 = arith.constant 0.000000e+00 : f32
    %82 = vector.broadcast %cst_15 : f32 to vector<32x128xf32>
    %83 = arith.maximumf %81, %82 : vector<32x128xf32>
    %c0_16 = arith.constant 0 : index
    %c0_17 = arith.constant 0 : index
    %84 = vector.load %arg7[%c0_16, %c0_17] : memref<32x32xf32, #tpu.memory_space<vmem>>, vector<32x32xf32>
    %cst_18 = arith.constant dense<0.000000e+00> : vector<32x128xf32>
    %85 = tpu.matmul %84, %13, %cst_18 {dimension_numbers = #tpu.dot_dimension_numbers<[1], [0], [0], [1], [0, 0, 1, 1], [], []>} : vector<32x32xf32>, vector<32x128xf32>, vector<32x128xf32> -> vector<32x128xf32>
    %c0_19 = arith.constant 0 : index
    %c0_20 = arith.constant 0 : index
    %86 = vector.load %arg8[%c0_19, %c0_20] : memref<32x1xf32, #tpu.memory_space<vmem>>, vector<32x1xf32>
    %87 = vector.broadcast %86 : vector<32x1xf32> to vector<32x128xf32>
    %88 = arith.addf %85, %87 : vector<32x128xf32>
    %89 = arith.mulf %83, %88 : vector<32x128xf32>
    %cst_21 = arith.constant dense<0.000000e+00> : vector<128xf32>
    %90 = vector.multi_reduction <add>, %89, %cst_21 [0] : vector<32x128xf32> to vector<128xf32>
    %91 = vector.shape_cast %90 : vector<128xf32> to vector<1x128xf32>
    %c0_22 = arith.constant 0 : index
    %c0_23 = arith.constant 0 : index
    %92 = vector.load %arg9[%c0_22, %c0_23] : memref<32x1xf32, #tpu.memory_space<vmem>>, vector<32x1xf32>
    %93 = vector.broadcast %92 : vector<32x1xf32> to vector<32x128xf32>
    %94 = arith.mulf %16, %93 : vector<32x128xf32>
    %cst_24 = arith.constant dense<0.000000e+00> : vector<128xf32>
    %95 = vector.multi_reduction <add>, %94, %cst_24 [0] : vector<32x128xf32> to vector<128xf32>
    %96 = vector.shape_cast %95 : vector<128xf32> to vector<1x128xf32>
    %c0_25 = arith.constant 0 : index
    %c0_26 = arith.constant 0 : index
    %97 = vector.load %arg10[%c0_25, %c0_26] : memref<1x1xf32, #tpu.memory_space<vmem>>, vector<1x1xf32>
    %98 = vector.broadcast %97 : vector<1x1xf32> to vector<1x128xf32>
    %99 = arith.addf %96, %98 : vector<1x128xf32>
    %100 = arith.addf %91, %99 : vector<1x128xf32>
    %c0_27 = arith.constant 0 : index
    %c0_28 = arith.constant 0 : index
    %101 = vector.load %arg11[%c0_27, %c0_28] : memref<1x128xf32, #tpu.memory_space<vmem>>, vector<1x128xf32>
    tpu.vector_store %arg11[%c0_27, %c0_28], %100 {strides = array<i32>} : memref<1x128xf32, #tpu.memory_space<vmem>>, vector<1x128xf32>,
    return
  }
  func.func @transform_0(%arg0: i32) -> (i32, i32) {
    %c0_i32 = arith.constant 0 : i32
    %c0_i32_0 = arith.constant 0 : i32
    return %c0_i32, %arg0 : i32, i32
  }
  func.func @transform_1(%arg0: i32) -> (i32, i32) {
    %c0_i32 = arith.constant 0 : i32
    %c0_i32_0 = arith.constant 0 : i32
    return %c0_i32, %arg0 : i32, i32
  }
  func.func @transform_2(%arg0: i32) -> (i32, i32) {
    %c0_i32 = arith.constant 0 : i32
    %c0_i32_0 = arith.constant 0 : i32
    %c0_i32_1 = arith.constant 0 : i32
    return %c0_i32, %c0_i32_0 : i32, i32
  }
  func.func @transform_3(%arg0: i32) -> (i32, i32) {
    %c0_i32 = arith.constant 0 : i32
    %c0_i32_0 = arith.constant 0 : i32
    %c0_i32_1 = arith.constant 0 : i32
    return %c0_i32, %c0_i32_0 : i32, i32
  }
  func.func @transform_4(%arg0: i32) -> (i32, i32) {
    %c0_i32 = arith.constant 0 : i32
    %c0_i32_0 = arith.constant 0 : i32
    %c0_i32_1 = arith.constant 0 : i32
    return %c0_i32, %c0_i32_0 : i32, i32
  }
  func.func @transform_5(%arg0: i32) -> (i32, i32) {
    %c0_i32 = arith.constant 0 : i32
    %c0_i32_0 = arith.constant 0 : i32
    %c0_i32_1 = arith.constant 0 : i32
    return %c0_i32, %c0_i32_0 : i32, i32
  }
  func.func @transform_6(%arg0: i32) -> (i32, i32) {
    %c0_i32 = arith.constant 0 : i32
    %c0_i32_0 = arith.constant 0 : i32
    %c0_i32_1 = arith.constant 0 : i32
    return %c0_i32, %c0_i32_0 : i32, i32
  }
  func.func @transform_7(%arg0: i32) -> (i32, i32) {
    %c0_i32 = arith.constant 0 : i32
    %c0_i32_0 = arith.constant 0 : i32
    %c0_i32_1 = arith.constant 0 : i32
    return %c0_i32, %c0_i32_0 : i32, i32
  }
  func.func @transform_8(%arg0: i32) -> (i32, i32) {
    %c0_i32 = arith.constant 0 : i32
    %c0_i32_0 = arith.constant 0 : i32
    %c0_i32_1 = arith.constant 0 : i32
    return %c0_i32, %c0_i32_0 : i32, i32
  }
  func.func @transform_9(%arg0: i32) -> (i32, i32) {
    %c0_i32 = arith.constant 0 : i32
    %c0_i32_0 = arith.constant 0 : i32
    %c0_i32_1 = arith.constant 0 : i32
    return %c0_i32, %c0_i32_0 : i32, i32
  }
  func.func @transform_10(%arg0: i32) -> (i32, i32) {
    %c0_i32 = arith.constant 0 : i32
    %c0_i32_0 = arith.constant 0 : i32
    return %c0_i32, %arg0 : i32, i32
  }
}

</mosaic_0001>

<llo_original>
// kernel: tpu_custom_call.1
$region0: #{tpu_custom_call.1}
  #allocation0 [shape = 'u32[]', space=smem, size = 0x4, offset = 0x4, fixed_abs, tag = 'smem constant byte address 0x4 - core index']
  #allocation1 [shape = 'u32[72,128]{1,0:T(1,128)}', space=vmem, size = 0x9000, scoped, tag = 'internal scratch']
  #allocation2 [shape = 'f32[1,1]{1,0:T(1,128)S(1)}', space=vmem, size = 0x200, scoped, tag = 'scoped memory for tpu_custom_call.1']
  %s0 = inlined_call_operand.vmem [shape: f32[12,128], index: 0, kind: input, shape index: {}]
  %s1 = inlined_call_operand.vmem [shape: f32[48,128], index: 1, kind: input, shape index: {}]
  %s2 = inlined_call_operand.vmem [shape: f32[128,48], index: 2, kind: input, shape index: {}]
  %s3 = inlined_call_operand.vmem [shape: f32[128,1], index: 3, kind: input, shape index: {}]
  %s4 = inlined_call_operand.vmem [shape: f32[384,32], index: 4, kind: input, shape index: {}]
  %s5 = inlined_call_operand.vmem [shape: f32[384,1], index: 5, kind: input, shape index: {}]
  %s6 = inlined_call_operand.vmem [shape: f32[32,32], index: 6, kind: input, shape index: {}]
  %s7 = inlined_call_operand.vmem [shape: f32[32,1], index: 7, kind: input, shape index: {}]
  %s8 = inlined_call_operand.vmem [shape: f32[32,1], index: 8, kind: input, shape index: {}]
  %s9 = inlined_call_operand.<no memory space> [shape: f32[1,1], index: 9, kind: input, shape index: {}]
  %s10 = inlined_call_operand.hbm [shape: f32[1,128], index: 10, kind: output, shape index: {}]
  %s11 = sld [smem:[#allocation0]]
  $region50: #{tpu_custom_call.1} parent=0
    _
  %s13 = ssub.s32 1, %s11
  %s14 = scalar_select 0, %s13, %s11
  %v15 = vstv %s9
  %16 = vst [vmem:[#allocation2] sm:$0x1] %v15
  $region1: #{tpu_custom_call.1} parent=0
    #allocation3 [shape = 'u8[512]{0}', space=vmem, size = 0x400, scoped, tag = 'output window, operand 0, single buffered']
    #allocation4 [shape = 's32[1]{0}', space=sflag, size = 0x4, scoped, tag = 'scoped memory for tpu_custom_call.1']
    %17 = vsyncpa [#allocation4], 0
    // Predicated region
    $region2: #{tpu_custom_call.1} parent=1 // pred_check
      _
    $region3: #{tpu_custom_call.1} parent=1 // pred_check_branch
      %19 = sbr.rel (0) target = $region5
    $region4: #{tpu_custom_call.1} parent=1 // pred_region
      _
    $region5: #{tpu_custom_call.1} parent=1 // pred_fallthru
      _
    // Predicated region
    $region6: #{tpu_custom_call.1} parent=1 // pred_check
      _
    $region7: #{tpu_custom_call.1} parent=1 // pred_check_branch
      %21 = sbr.rel (0) target = $region9
    $region8: #{tpu_custom_call.1} parent=1 // pred_region
      _
    $region9: #{tpu_custom_call.1} parent=1 // pred_fallthru
      _
    // Predicated region
    $region10: #{tpu_custom_call.1} parent=1 // pred_check
      _
    $region11: #{tpu_custom_call.1} parent=1 // pred_check_branch
      %23 = sbr.rel (0) target = $region13
    $region12: #{tpu_custom_call.1} parent=1 // pred_region
      _
    $region13: #{tpu_custom_call.1} parent=1 // pred_fallthru
      _
    // Predicated region
    $region14: #{tpu_custom_call.1} parent=1 // pred_check
      _
    $region15: #{tpu_custom_call.1} parent=1 // pred_check_branch
      %25 = sbr.rel (0) target = $region17
    $region16: #{tpu_custom_call.1} parent=1 // pred_region
      _
    $region17: #{tpu_custom_call.1} parent=1 // pred_fallthru
      _
    // Predicated region
    $region18: #{tpu_custom_call.1} parent=1 // pred_check
      _
    $region19: #{tpu_custom_call.1} parent=1 // pred_check_branch
      %27 = sbr.rel (0) target = $region21
    $region20: #{tpu_custom_call.1} parent=1 // pred_region
      _
    $region21: #{tpu_custom_call.1} parent=1 // pred_fallthru
      _
    // Predicated region
    $region22: #{tpu_custom_call.1} parent=1 // pred_check
      _
    $region23: #{tpu_custom_call.1} parent=1 // pred_check_branch
      %29 = sbr.rel (0) target = $region25
    $region24: #{tpu_custom_call.1} parent=1 // pred_region
      _
    $region25: #{tpu_custom_call.1} parent=1 // pred_fallthru
      _
    // Predicated region
    $region26: #{tpu_custom_call.1} parent=1 // pred_check
      _
    $region27: #{tpu_custom_call.1} parent=1 // pred_check_branch
      %31 = sbr.rel (0) target = $region29
    $region28: #{tpu_custom_call.1} parent=1 // pred_region
      _
    $region29: #{tpu_custom_call.1} parent=1 // pred_fallthru
      _
    // Predicated region
    $region30: #{tpu_custom_call.1} parent=1 // pred_check
      _
    $region31: #{tpu_custom_call.1} parent=1 // pred_check_branch
      %33 = sbr.rel (0) target = $region33
    $region32: #{tpu_custom_call.1} parent=1 // pred_region
      _
    $region33: #{tpu_custom_call.1} parent=1 // pred_fallthru
      _
    // Predicated region
    $region34: #{tpu_custom_call.1} parent=1 // pred_check
      _
    $region35: #{tpu_custom_call.1} parent=1 // pred_check_branch
      %35 = sbr.rel (0) target = $region37
    $region36: #{tpu_custom_call.1} parent=1 // pred_region
      _
    $region37: #{tpu_custom_call.1} parent=1 // pred_fallthru
      _
    // Predicated region
    $region38: #{tpu_custom_call.1} parent=1 // pred_check
      _
    $region39: #{tpu_custom_call.1} parent=1 // pred_check_branch
      %37 = sbr.rel (0) target = $region41
    $region40: #{tpu_custom_call.1} parent=1 // pred_region
      _
    $region41: #{tpu_custom_call.1} parent=1 // pred_fallthru
      _
    %v38 = vld [vmem:[%s1] sm:$0xff]
    %v39 = vld [vmem:[%s1 + $0x8] sm:$0xff]
    %v40 = vld [vmem:[%s1 + $0x10] sm:$0xff]
    %v41 = vld [vmem:[%s1 + $0x18] sm:$0xff]
    %v42 = vld [vmem:[%s1 + $0x20] sm:$0xff]
    %v43 = vld [vmem:[%s1 + $0x28] sm:$0xff]
    %v44 = vld [vmem:[%s0] sm:$0xff]
    %v45 = vld [vmem:[%s0 + $0x8] sm:$0xf]
    %v46 = vld [vmem:[%s2] sm:$0xff]
    %v47 = vld [vmem:[%s2 + $0x8] sm:$0xff]
    %v48 = vld [vmem:[%s2 + $0x10] sm:$0xff]
    %v49 = vld [vmem:[%s2 + $0x18] sm:$0xff]
    %v50 = vld [vmem:[%s2 + $0x20] sm:$0xff]
    %v51 = vld [vmem:[%s2 + $0x28] sm:$0xff]
    %v52 = vld [vmem:[%s2 + $0x30] sm:$0xff]
    %v53 = vld [vmem:[%s2 + $0x38] sm:$0xff]
    %v54 = vld [vmem:[%s2 + $0x40] sm:$0xff]
    %v55 = vld [vmem:[%s2 + $0x48] sm:$0xff]
    %v56 = vld [vmem:[%s2 + $0x50] sm:$0xff]
    %v57 = vld [vmem:[%s2 + $0x58] sm:$0xff]
    %v58 = vld [vmem:[%s2 + $0x60] sm:$0xff]
    %v59 = vld [vmem:[%s2 + $0x68] sm:$0xff]
    %v60 = vld [vmem:[%s2 + $0x70] sm:$0xff]
    %v61 = vld [vmem:[%s2 + $0x78] sm:$0xff]
    %v62 = vld [vmem:[%s3] sm:$0xff]
    %v63 = vld [vmem:[%s3 + $0x8] sm:$0xff]
    %v64 = vld [vmem:[%s3 + $0x10] sm:$0xff]
    %v65 = vld [vmem:[%s3 + $0x18] sm:$0xff]
    %v66 = vld [vmem:[%s3 + $0x20] sm:$0xff]
    %v67 = vld [vmem:[%s3 + $0x28] sm:$0xff]
    %v68 = vld [vmem:[%s3 + $0x30] sm:$0xff]
    %v69 = vld [vmem:[%s3 + $0x38] sm:$0xff]
    %v70 = vld [vmem:[%s3 + $0x40] sm:$0xff]
    %v71 = vld [vmem:[%s3 + $0x48] sm:$0xff]
    %v72 = vld [vmem:[%s3 + $0x50] sm:$0xff]
    %v73 = vld [vmem:[%s3 + $0x58] sm:$0xff]
    %v74 = vld [vmem:[%s3 + $0x60] sm:$0xff]
    %v75 = vld [vmem:[%s3 + $0x68] sm:$0xff]
    %v76 = vld [vmem:[%s3 + $0x70] sm:$0xff]
    %v77 = vld [vmem:[%s3 + $0x78] sm:$0xff]
    %79 = vset.pattern.permute.xlu0 0
    %80 = vperm.xlu0 %79, %v62
    %v81 = vpop.permute.xlu0 %80
    %84 = vset.pattern.permute.xlu0 0
    %85 = vperm.xlu0 %84, %v63
    %v86 = vpop.permute.xlu0 %85
    %89 = vset.pattern.permute.xlu0 0
    %90 = vperm.xlu0 %89, %v64
    %v91 = vpop.permute.xlu0 %90
    %94 = vset.pattern.permute.xlu0 0
    %95 = vperm.xlu0 %94, %v65
    %v96 = vpop.permute.xlu0 %95
    %99 = vset.pattern.permute.xlu0 0
    %100 = vperm.xlu0 %99, %v66
    %v101 = vpop.permute.xlu0 %100
    %104 = vset.pattern.permute.xlu0 0
    %105 = vperm.xlu0 %104, %v67
    %v106 = vpop.permute.xlu0 %105
    %109 = vset.pattern.permute.xlu0 0
    %110 = vperm.xlu0 %109, %v68
    %v111 = vpop.permute.xlu0 %110
    %114 = vset.pattern.permute.xlu0 0
    %115 = vperm.xlu0 %114, %v69
    %v116 = vpop.permute.xlu0 %115
    %119 = vset.pattern.permute.xlu0 0
    %120 = vperm.xlu0 %119, %v70
    %v121 = vpop.permute.xlu0 %120
    %124 = vset.pattern.permute.xlu0 0
    %125 = vperm.xlu0 %124, %v71
    %v126 = vpop.permute.xlu0 %125
    %129 = vset.pattern.permute.xlu0 0
    %130 = vperm.xlu0 %129, %v72
    %v131 = vpop.permute.xlu0 %130
    %134 = vset.pattern.permute.xlu0 0
    %135 = vperm.xlu0 %134, %v73
    %v136 = vpop.permute.xlu0 %135
    %139 = vset.pattern.permute.xlu0 0
    %140 = vperm.xlu0 %139, %v74
    %v141 = vpop.permute.xlu0 %140
    %144 = vset.pattern.permute.xlu0 0
    %145 = vperm.xlu0 %144, %v75
    %v146 = vpop.permute.xlu0 %145
    %149 = vset.pattern.permute.xlu0 0
    %150 = vperm.xlu0 %149, %v76
    %v151 = vpop.permute.xlu0 %150
    %154 = vset.pattern.permute.xlu0 0
    %155 = vperm.xlu0 %154, %v77
    %v156 = vpop.permute.xlu0 %155
    %vm158 = vcmask 392192
    %v160 = vsel %vm158, %v46, 0
    %v163 = vsel %vm158, %v47, 0
    %v166 = vsel %vm158, %v48, 0
    %v169 = vsel %vm158, %v49, 0
    %v172 = vsel %vm158, %v50, 0
    %v175 = vsel %vm158, %v51, 0
    %v178 = vsel %vm158, %v52, 0
    %v181 = vsel %vm158, %v53, 0
    %v184 = vsel %vm158, %v54, 0
    %v187 = vsel %vm158, %v55, 0
    %v190 = vsel %vm158, %v56, 0
    %v193 = vsel %vm158, %v57, 0
    %v196 = vsel %vm158, %v58, 0
    %v199 = vsel %vm158, %v59, 0
    %v202 = vsel %vm158, %v60, 0
    %v205 = vsel %vm158, %v61, 0
    %207 = vmatpush.msra.mxu0 0.0
    %208 = vmatpush.msra.mxu0 0.0
    %209 = vmatpush.msra.mxu0 0.0
    %210 = vmatpush.msra.mxu0 0.0
    %211 = vmatpush.msra.mxu0 0.0
    %212 = vmatpush.msra.mxu0 0.0
    %213 = vmatpush.msra.mxu0 0.0
    %214 = vmatpush.msra.mxu0 0.0
    %215 = vmatpush.msra.mxu0 0.0
    %216 = vmatpush.msra.mxu0 0.0
    %217 = vmatpush.msra.mxu0 %v43
    %218 = vmatpush.msra.mxu0 %v42
    %219 = vmatpush.msra.mxu0 %v41
    %220 = vmatpush.msra.mxu0 %v40
    %221 = vmatpush.msra.mxu0 %v39
    %222 = vmatpush.msra.mxu0 %v38
    %223 = vmatmul.f32.gmra.mxu0 %v160
    %v224 = vpop.f32.mrf.mxu0
    %v225 = vadd.f32 %v81, %v224
    %226 = vmatmul.f32.gmra.mxu0 %v163
    %v227 = vpop.f32.mrf.mxu0
    %v228 = vadd.f32 %v86, %v227
    %229 = vmatmul.f32.gmra.mxu0 %v166
    %v230 = vpop.f32.mrf.mxu0
    %v231 = vadd.f32 %v91, %v230
    %232 = vmatmul.f32.gmra.mxu0 %v169
    %v233 = vpop.f32.mrf.mxu0
    %v234 = vadd.f32 %v96, %v233
    %235 = vmatmul.f32.gmra.mxu0 %v172
    %v236 = vpop.f32.mrf.mxu0
    %v237 = vadd.f32 %v101, %v236
    %238 = vmatmul.f32.gmra.mxu0 %v175
    %v239 = vpop.f32.mrf.mxu0
    %v240 = vadd.f32 %v106, %v239
    %241 = vmatmul.f32.gmra.mxu0 %v178
    %v242 = vpop.f32.mrf.mxu0
    %v243 = vadd.f32 %v111, %v242
    %244 = vmatmul.f32.gmra.mxu0 %v181
    %v245 = vpop.f32.mrf.mxu0
    %v246 = vadd.f32 %v116, %v245
    %247 = vmatmul.f32.gmra.mxu0 %v184
    %v248 = vpop.f32.mrf.mxu0
    %v249 = vadd.f32 %v121, %v248
    %250 = vmatmul.f32.gmra.mxu0 %v187
    %v251 = vpop.f32.mrf.mxu0
    %v252 = vadd.f32 %v126, %v251
    %253 = vmatmul.f32.gmra.mxu0 %v190
    %v254 = vpop.f32.mrf.mxu0
    %v255 = vadd.f32 %v131, %v254
    %256 = vmatmul.f32.gmra.mxu0 %v193
    %v257 = vpop.f32.mrf.mxu0
    %v258 = vadd.f32 %v136, %v257
    %259 = vmatmul.f32.gmra.mxu0 %v196
    %v260 = vpop.f32.mrf.mxu0
    %v261 = vadd.f32 %v141, %v260
    %262 = vmatmul.f32.gmra.mxu0 %v199
    %v263 = vpop.f32.mrf.mxu0
    %v264 = vadd.f32 %v146, %v263
    %265 = vmatmul.f32.gmra.mxu0 %v202
    %v266 = vpop.f32.mrf.mxu0
    %v267 = vadd.f32 %v151, %v266
    %268 = vmatmul.f32.gmra.mxu0 %v205
    %v269 = vpop.f32.mrf.mxu0
    %v270 = vadd.f32 %v156, %v269
    %271 = vdwg.mxu0
    %v272 = vmax.f32 %v225, 0.0
    %v273 = vmax.f32 %v228, 0.0
    %v274 = vmax.f32 %v231, 0.0
    %v275 = vmax.f32 %v234, 0.0
    %v276 = vmax.f32 %v249, 0.0
    %v277 = vmax.f32 %v252, 0.0
    %v278 = vmax.f32 %v255, 0.0
    %v279 = vmax.f32 %v258, 0.0
    %v280 = vmax.f32 %v261, 0.0
    %v281 = vmax.f32 %v264, 0.0
    %v282 = vmax.f32 %v267, 0.0
    %v283 = vmax.f32 %v270, 0.0
    %v284 = vld [vmem:[%s4] sm:$0xff]
    %v285 = vld [vmem:[%s4 + $0x8] sm:$0xff]
    %v286 = vld [vmem:[%s4 + $0x10] sm:$0xff]
    %v287 = vld [vmem:[%s4 + $0x18] sm:$0xff]
    %v288 = vld [vmem:[%s4 + $0x20] sm:$0xff]
    %v289 = vld [vmem:[%s4 + $0x28] sm:$0xff]
    %v290 = vld [vmem:[%s4 + $0x30] sm:$0xff]
    %v291 = vld [vmem:[%s4 + $0x38] sm:$0xff]
    %v292 = vld [vmem:[%s4 + $0x40] sm:$0xff]
    %v293 = vld [vmem:[%s4 + $0x48] sm:$0xff]
    %v294 = vld [vmem:[%s4 + $0x50] sm:$0xff]
    %v295 = vld [vmem:[%s4 + $0x58] sm:$0xff]
    %v296 = vld [vmem:[%s4 + $0x60] sm:$0xff]
    %v297 = vld [vmem:[%s4 + $0x68] sm:$0xff]
    %v298 = vld [vmem:[%s4 + $0x70] sm:$0xff]
    %v299 = vld [vmem:[%s4 + $0x78] sm:$0xff]
    %v300 = vld [vmem:[%s4 + $0x80] sm:$0xff]
    %v301 = vld [vmem:[%s4 + $0x88] sm:$0xff]
    %v302 = vld [vmem:[%s4 + $0x90] sm:$0xff]
    %v303 = vld [vmem:[%s4 + $0x98] sm:$0xff]
    %v304 = vld [vmem:[%s4 + $0xa0] sm:$0xff]
    %v305 = vld [vmem:[%s4 + $0xa8] sm:$0xff]
    %v306 = vld [vmem:[%s4 + $0xb0] sm:$0xff]
    %v307 = vld [vmem:[%s4 + $0xb8] sm:$0xff]
    %v308 = vld [vmem:[%s4 + $0xc0] sm:$0xff]
    %v309 = vld [vmem:[%s4 + $0xc8] sm:$0xff]
    %v310 = vld [vmem:[%s4 + $0xd0] sm:$0xff]
    %v311 = vld [vmem:[%s4 + $0xd8] sm:$0xff]
    %v312 = vld [vmem:[%s4 + $0xe0] sm:$0xff]
    %v313 = vld [vmem:[%s4 + $0xe8] sm:$0xff]
    %v314 = vld [vmem:[%s4 + $0xf0] sm:$0xff]
    %v315 = vld [vmem:[%s4 + $0xf8] sm:$0xff]
    %v316 = vld [vmem:[%s4 + $0x100] sm:$0xff]
    %v317 = vld [vmem:[%s4 + $0x108] sm:$0xff]
    %v318 = vld [vmem:[%s4 + $0x110] sm:$0xff]
    %v319 = vld [vmem:[%s4 + $0x118] sm:$0xff]
    %v320 = vld [vmem:[%s4 + $0x120] sm:$0xff]
    %v321 = vld [vmem:[%s4 + $0x128] sm:$0xff]
    %v322 = vld [vmem:[%s4 + $0x130] sm:$0xff]
    %v323 = vld [vmem:[%s4 + $0x138] sm:$0xff]
    %v324 = vld [vmem:[%s4 + $0x140] sm:$0xff]
    %v325 = vld [vmem:[%s4 + $0x148] sm:$0xff]
    %v326 = vld [vmem:[%s4 + $0x150] sm:$0xff]
    %v327 = vld [vmem:[%s4 + $0x158] sm:$0xff]
    %v328 = vld [vmem:[%s4 + $0x160] sm:$0xff]
    %v329 = vld [vmem:[%s4 + $0x168] sm:$0xff]
    %v330 = vld [vmem:[%s4 + $0x170] sm:$0xff]
    %v331 = vld [vmem:[%s4 + $0x178] sm:$0xff]
    %v332 = vld [vmem:[%s5] sm:$0xff]
    %v333 = vld [vmem:[%s5 + $0x8] sm:$0xff]
    %v334 = vld [vmem:[%s5 + $0x10] sm:$0xff]
    %v335 = vld [vmem:[%s5 + $0x18] sm:$0xff]
    %v336 = vld [vmem:[%s5 + $0x20] sm:$0xff]
    %v337 = vld [vmem:[%s5 + $0x28] sm:$0xff]
    %v338 = vld [vmem:[%s5 + $0x30] sm:$0xff]
    %v339 = vld [vmem:[%s5 + $0x38] sm:$0xff]
    %v340 = vld [vmem:[%s5 + $0x40] sm:$0xff]
    %v341 = vld [vmem:[%s5 + $0x48] sm:$0xff]
    %v342 = vld [vmem:[%s5 + $0x50] sm:$0xff]
    %v343 = vld [vmem:[%s5 + $0x58] sm:$0xff]
    %v344 = vld [vmem:[%s5 + $0x60] sm:$0xff]
    %v345 = vld [vmem:[%s5 + $0x68] sm:$0xff]
    %v346 = vld [vmem:[%s5 + $0x70] sm:$0xff]
    %v347 = vld [vmem:[%s5 + $0x78] sm:$0xff]
    %v348 = vld [vmem:[%s5 + $0x80] sm:$0xff]
    %v349 = vld [vmem:[%s5 + $0x88] sm:$0xff]
    %v350 = vld [vmem:[%s5 + $0x90] sm:$0xff]
    %v351 = vld [vmem:[%s5 + $0x98] sm:$0xff]
    %v352 = vld [vmem:[%s5 + $0xa0] sm:$0xff]
    %v353 = vld [vmem:[%s5 + $0xa8] sm:$0xff]
    %v354 = vld [vmem:[%s5 + $0xb0] sm:$0xff]
    %v355 = vld [vmem:[%s5 + $0xb8] sm:$0xff]
    %v356 = vld [vmem:[%s5 + $0xc0] sm:$0xff]
    %v357 = vld [vmem:[%s5 + $0xc8] sm:$0xff]
    %v358 = vld [vmem:[%s5 + $0xd0] sm:$0xff]
    %v359 = vld [vmem:[%s5 + $0xd8] sm:$0xff]
    %v360 = vld [vmem:[%s5 + $0xe0] sm:$0xff]
    %v361 = vld [vmem:[%s5 + $0xe8] sm:$0xff]
    %v362 = vld [vmem:[%s5 + $0xf0] sm:$0xff]
    %v363 = vld [vmem:[%s5 + $0xf8] sm:$0xff]
    %v364 = vld [vmem:[%s5 + $0x100] sm:$0xff]
    %v365 = vld [vmem:[%s5 + $0x108] sm:$0xff]
    %v366 = vld [vmem:[%s5 + $0x110] sm:$0xff]
    %v367 = vld [vmem:[%s5 + $0x118] sm:$0xff]
    %v368 = vld [vmem:[%s5 + $0x120] sm:$0xff]
    %v369 = vld [vmem:[%s5 + $0x128] sm:$0xff]
    %v370 = vld [vmem:[%s5 + $0x130] sm:$0xff]
    %v371 = vld [vmem:[%s5 + $0x138] sm:$0xff]
    %v372 = vld [vmem:[%s5 + $0x140] sm:$0xff]
    %v373 = vld [vmem:[%s5 + $0x148] sm:$0xff]
    %v374 = vld [vmem:[%s5 + $0x150] sm:$0xff]
    %v375 = vld [vmem:[%s5 + $0x158] sm:$0xff]
    %v376 = vld [vmem:[%s5 + $0x160] sm:$0xff]
    %v377 = vld [vmem:[%s5 + $0x168] sm:$0xff]
    %v378 = vld [vmem:[%s5 + $0x170] sm:$0xff]
    %v379 = vld [vmem:[%s5 + $0x178] sm:$0xff]
    %381 = vset.pattern.permute.xlu0 0
    %382 = vperm.xlu0 %381, %v332
    %v383 = vpop.permute.xlu0 %382
    %386 = vset.pattern.permute.xlu0 0
    %387 = vperm.xlu0 %386, %v333
    %v388 = vpop.permute.xlu0 %387
    %391 = vset.pattern.permute.xlu0 0
    %392 = vperm.xlu0 %391, %v334
    %v393 = vpop.permute.xlu0 %392
    %396 = vset.pattern.permute.xlu0 0
    %397 = vperm.xlu0 %396, %v335
    %v398 = vpop.permute.xlu0 %397
    %401 = vset.pattern.permute.xlu0 0
    %402 = vperm.xlu0 %401, %v336
    %v403 = vpop.permute.xlu0 %402
    %406 = vset.pattern.permute.xlu0 0
    %407 = vperm.xlu0 %406, %v337
    %v408 = vpop.permute.xlu0 %407
    %411 = vset.pattern.permute.xlu0 0
    %412 = vperm.xlu0 %411, %v338
    %v413 = vpop.permute.xlu0 %412
    %416 = vset.pattern.permute.xlu0 0
    %417 = vperm.xlu0 %416, %v339
    %v418 = vpop.permute.xlu0 %417
    %421 = vset.pattern.permute.xlu0 0
    %422 = vperm.xlu0 %421, %v340
    %v423 = vpop.permute.xlu0 %422
    %426 = vset.pattern.permute.xlu0 0
    %427 = vperm.xlu0 %426, %v341
    %v428 = vpop.permute.xlu0 %427
    %431 = vset.pattern.permute.xlu0 0
    %432 = vperm.xlu0 %431, %v342
    %v433 = vpop.permute.xlu0 %432
    %436 = vset.pattern.permute.xlu0 0
    %437 = vperm.xlu0 %436, %v343
    %v438 = vpop.permute.xlu0 %437
    %441 = vset.pattern.permute.xlu0 0
    %442 = vperm.xlu0 %441, %v344
    %v443 = vpop.permute.xlu0 %442
    %446 = vset.pattern.permute.xlu0 0
    %447 = vperm.xlu0 %446, %v345
    %v448 = vpop.permute.xlu0 %447
    %451 = vset.pattern.permute.xlu0 0
    %452 = vperm.xlu0 %451, %v346
    %v453 = vpop.permute.xlu0 %452
    %456 = vset.pattern.permute.xlu0 0
    %457 = vperm.xlu0 %456, %v347
    %v458 = vpop.permute.xlu0 %457
    %461 = vset.pattern.permute.xlu0 0
    %462 = vperm.xlu0 %461, %v348
    %v463 = vpop.permute.xlu0 %462
    %466 = vset.pattern.permute.xlu0 0
    %467 = vperm.xlu0 %466, %v349
    %v468 = vpop.permute.xlu0 %467
    %471 = vset.pattern.permute.xlu0 0
    %472 = vperm.xlu0 %471, %v350
    %v473 = vpop.permute.xlu0 %472
    %476 = vset.pattern.permute.xlu0 0
    %477 = vperm.xlu0 %476, %v351
    %v478 = vpop.permute.xlu0 %477
    %481 = vset.pattern.permute.xlu0 0
    %482 = vperm.xlu0 %481, %v352
    %v483 = vpop.permute.xlu0 %482
    %486 = vset.pattern.permute.xlu0 0
    %487 = vperm.xlu0 %486, %v353
    %v488 = vpop.permute.xlu0 %487
    %491 = vset.pattern.permute.xlu0 0
    %492 = vperm.xlu0 %491, %v354
    %v493 = vpop.permute.xlu0 %492
    %496 = vset.pattern.permute.xlu0 0
    %497 = vperm.xlu0 %496, %v355
    %v498 = vpop.permute.xlu0 %497
    %501 = vset.pattern.permute.xlu0 0
    %502 = vperm.xlu0 %501, %v356
    %v503 = vpop.permute.xlu0 %502
    %506 = vset.pattern.permute.xlu0 0
    %507 = vperm.xlu0 %506, %v357
    %v508 = vpop.permute.xlu0 %507
    %511 = vset.pattern.permute.xlu0 0
    %512 = vperm.xlu0 %511, %v358
    %v513 = vpop.permute.xlu0 %512
    %516 = vset.pattern.permute.xlu0 0
    %517 = vperm.xlu0 %516, %v359
    %v518 = vpop.permute.xlu0 %517
    %521 = vset.pattern.permute.xlu0 0
    %522 = vperm.xlu0 %521, %v360
    %v523 = vpop.permute.xlu0 %522
    %526 = vset.pattern.permute.xlu0 0
    %527 = vperm.xlu0 %526, %v361
    %v528 = vpop.permute.xlu0 %527
    %531 = vset.pattern.permute.xlu0 0
    %532 = vperm.xlu0 %531, %v362
    %v533 = vpop.permute.xlu0 %532
    %536 = vset.pattern.permute.xlu0 0
    %537 = vperm.xlu0 %536, %v363
    %v538 = vpop.permute.xlu0 %537
    %541 = vset.pattern.permute.xlu0 0
    %542 = vperm.xlu0 %541, %v364
    %v543 = vpop.permute.xlu0 %542
    %546 = vset.pattern.permute.xlu0 0
    %547 = vperm.xlu0 %546, %v365
    %v548 = vpop.permute.xlu0 %547
    %551 = vset.pattern.permute.xlu0 0
    %552 = vperm.xlu0 %551, %v366
    %v553 = vpop.permute.xlu0 %552
    %556 = vset.pattern.permute.xlu0 0
    %557 = vperm.xlu0 %556, %v367
    %v558 = vpop.permute.xlu0 %557
    %561 = vset.pattern.permute.xlu0 0
    %562 = vperm.xlu0 %561, %v368
    %v563 = vpop.permute.xlu0 %562
    %566 = vset.pattern.permute.xlu0 0
    %567 = vperm.xlu0 %566, %v369
    %v568 = vpop.permute.xlu0 %567
    %571 = vset.pattern.permute.xlu0 0
    %572 = vperm.xlu0 %571, %v370
    %v573 = vpop.permute.xlu0 %572
    %576 = vset.pattern.permute.xlu0 0
    %577 = vperm.xlu0 %576, %v371
    %v578 = vpop.permute.xlu0 %577
    %581 = vset.pattern.permute.xlu0 0
    %582 = vperm.xlu0 %581, %v372
    %v583 = vpop.permute.xlu0 %582
    %586 = vset.pattern.permute.xlu0 0
    %587 = vperm.xlu0 %586, %v373
    %v588 = vpop.permute.xlu0 %587
    %591 = vset.pattern.permute.xlu0 0
    %592 = vperm.xlu0 %591, %v374
    %v593 = vpop.permute.xlu0 %592
    %596 = vset.pattern.permute.xlu0 0
    %597 = vperm.xlu0 %596, %v375
    %v598 = vpop.permute.xlu0 %597
    %601 = vset.pattern.permute.xlu0 0
    %602 = vperm.xlu0 %601, %v376
    %v603 = vpop.permute.xlu0 %602
    %606 = vset.pattern.permute.xlu0 0
    %607 = vperm.xlu0 %606, %v377
    %v608 = vpop.permute.xlu0 %607
    %611 = vset.pattern.permute.xlu0 0
    %612 = vperm.xlu0 %611, %v378
    %v613 = vpop.permute.xlu0 %612
    %616 = vset.pattern.permute.xlu0 0
    %617 = vperm.xlu0 %616, %v379
    %v618 = vpop.permute.xlu0 %617
    %vm620 = vcmask 261120
    %v622 = vsel %vm620, %v284, 0
    %v625 = vsel %vm620, %v285, 0
    %v628 = vsel %vm620, %v286, 0
    %v631 = vsel %vm620, %v287, 0
    %v634 = vsel %vm620, %v288, 0
    %v637 = vsel %vm620, %v289, 0
    %v640 = vsel %vm620, %v290, 0
    %v643 = vsel %vm620, %v291, 0
    %v646 = vsel %vm620, %v292, 0
    %v649 = vsel %vm620, %v293, 0
    %v652 = vsel %vm620, %v294, 0
    %v655 = vsel %vm620, %v295, 0
    %v658 = vsel %vm620, %v296, 0
    %v661 = vsel %vm620, %v297, 0
    %v664 = vsel %vm620, %v298, 0
    %v667 = vsel %vm620, %v299, 0
    %v670 = vsel %vm620, %v300, 0
    %v673 = vsel %vm620, %v301, 0
    %v676 = vsel %vm620, %v302, 0
    %v679 = vsel %vm620, %v303, 0
    %v682 = vsel %vm620, %v304, 0
    %v685 = vsel %vm620, %v305, 0
    %v688 = vsel %vm620, %v306, 0
    %v691 = vsel %vm620, %v307, 0
    %v694 = vsel %vm620, %v308, 0
    %v697 = vsel %vm620, %v309, 0
    %v700 = vsel %vm620, %v310, 0
    %v703 = vsel %vm620, %v311, 0
    %v706 = vsel %vm620, %v312, 0
    %v709 = vsel %vm620, %v313, 0
    %v712 = vsel %vm620, %v314, 0
    %v715 = vsel %vm620, %v315, 0
    %v718 = vsel %vm620, %v316, 0
    %v721 = vsel %vm620, %v317, 0
    %v724 = vsel %vm620, %v318, 0
    %v727 = vsel %vm620, %v319, 0
    %v730 = vsel %vm620, %v320, 0
    %v733 = vsel %vm620, %v321, 0
    %v736 = vsel %vm620, %v322, 0
    %v739 = vsel %vm620, %v323, 0
    %v742 = vsel %vm620, %v324, 0
    %v745 = vsel %vm620, %v325, 0
    %v748 = vsel %vm620, %v326, 0
    %v751 = vsel %vm620, %v327, 0
    %v754 = vsel %vm620, %v328, 0
    %v757 = vsel %vm620, %v329, 0
    %v760 = vsel %vm620, %v330, 0
    %v763 = vsel %vm620, %v331, 0
    %765 = vmatpush.msra.mxu0 0.0
    %766 = vmatpush.msra.mxu0 0.0
    %767 = vmatpush.msra.mxu0 0.0
    %768 = vmatpush.msra.mxu0 0.0
    %769 = vmatpush.msra.mxu0 0.0
    %770 = vmatpush.msra.mxu0 0.0
    %771 = vmatpush.msra.mxu0 0.0
    %772 = vmatpush.msra.mxu0 0.0
    %773 = vmatpush.msra.mxu0 0.0
    %774 = vmatpush.msra.mxu0 0.0
    %775 = vmatpush.msra.mxu0 0.0
    %776 = vmatpush.msra.mxu0 0.0
    %777 = vmatpush.msra.mxu0 %v275
    %778 = vmatpush.msra.mxu0 %v274
    %779 = vmatpush.msra.mxu0 %v273
    %780 = vmatpush.msra.mxu0 %v272
    %781 = vmatmul.f32.gmra.mxu0 %v622
    %v782 = vpop.f32.mrf.mxu0
    %v783 = vadd.f32 %v383, %v782
    %784 = vmatmul.f32.gmra.mxu0 %v625
    %v785 = vpop.f32.mrf.mxu0
    %v786 = vadd.f32 %v388, %v785
    %787 = vmatmul.f32.gmra.mxu0 %v628
    %v788 = vpop.f32.mrf.mxu0
    %v789 = vadd.f32 %v393, %v788
    %790 = vmatmul.f32.gmra.mxu0 %v631
    %v791 = vpop.f32.mrf.mxu0
    %v792 = vadd.f32 %v398, %v791
    %793 = vmatmul.f32.gmra.mxu0 %v634
    %v794 = vpop.f32.mrf.mxu0
    %v795 = vadd.f32 %v403, %v794
    %796 = vmatmul.f32.gmra.mxu0 %v637
    %v797 = vpop.f32.mrf.mxu0
    %v798 = vadd.f32 %v408, %v797
    %799 = vmatmul.f32.gmra.mxu0 %v640
    %v800 = vpop.f32.mrf.mxu0
    %v801 = vadd.f32 %v413, %v800
    %802 = vmatmul.f32.gmra.mxu0 %v643
    %v803 = vpop.f32.mrf.mxu0
    %v804 = vadd.f32 %v418, %v803
    %805 = vmatmul.f32.gmra.mxu0 %v646
    %v806 = vpop.f32.mrf.mxu0
    %v807 = vadd.f32 %v423, %v806
    %808 = vmatmul.f32.gmra.mxu0 %v649
    %v809 = vpop.f32.mrf.mxu0
    %v810 = vadd.f32 %v428, %v809
    %811 = vmatmul.f32.gmra.mxu0 %v652
    %v812 = vpop.f32.mrf.mxu0
    %v813 = vadd.f32 %v433, %v812
    %814 = vmatmul.f32.gmra.mxu0 %v655
    %v815 = vpop.f32.mrf.mxu0
    %v816 = vadd.f32 %v438, %v815
    %817 = vmatmul.f32.gmra.mxu0 %v658
    %v818 = vpop.f32.mrf.mxu0
    %v819 = vadd.f32 %v443, %v818
    %820 = vmatmul.f32.gmra.mxu0 %v661
    %v821 = vpop.f32.mrf.mxu0
    %v822 = vadd.f32 %v448, %v821
    %823 = vmatmul.f32.gmra.mxu0 %v664
    %v824 = vpop.f32.mrf.mxu0
    %v825 = vadd.f32 %v453, %v824
    %826 = vmatmul.f32.gmra.mxu0 %v667
    %v827 = vpop.f32.mrf.mxu0
    %v828 = vadd.f32 %v458, %v827
    %829 = vmatmul.f32.gmra.mxu0 %v670
    %v830 = vpop.f32.mrf.mxu0
    %v831 = vadd.f32 %v463, %v830
    %832 = vmatmul.f32.gmra.mxu0 %v673
    %v833 = vpop.f32.mrf.mxu0
    %v834 = vadd.f32 %v468, %v833
    %835 = vmatmul.f32.gmra.mxu0 %v676
    %v836 = vpop.f32.mrf.mxu0
    %v837 = vadd.f32 %v473, %v836
    %838 = vmatmul.f32.gmra.mxu0 %v679
    %v839 = vpop.f32.mrf.mxu0
    %v840 = vadd.f32 %v478, %v839
    %841 = vmatmul.f32.gmra.mxu0 %v682
    %v842 = vpop.f32.mrf.mxu0
    %v843 = vadd.f32 %v483, %v842
    %844 = vmatmul.f32.gmra.mxu0 %v685
    %v845 = vpop.f32.mrf.mxu0
    %v846 = vadd.f32 %v488, %v845
    %847 = vmatmul.f32.gmra.mxu0 %v688
    %v848 = vpop.f32.mrf.mxu0
    %v849 = vadd.f32 %v493, %v848
    %850 = vmatmul.f32.gmra.mxu0 %v691
    %v851 = vpop.f32.mrf.mxu0
    %v852 = vadd.f32 %v498, %v851
    %853 = vmatmul.f32.gmra.mxu0 %v694
    %v854 = vpop.f32.mrf.mxu0
    %v855 = vadd.f32 %v503, %v854
    %856 = vmatmul.f32.gmra.mxu0 %v697
    %v857 = vpop.f32.mrf.mxu0
    %v858 = vadd.f32 %v508, %v857
    %859 = vmatmul.f32.gmra.mxu0 %v700
    %v860 = vpop.f32.mrf.mxu0
    %v861 = vadd.f32 %v513, %v860
    %862 = vmatmul.f32.gmra.mxu0 %v703
    %v863 = vpop.f32.mrf.mxu0
    %v864 = vadd.f32 %v518, %v863
    %865 = vmatmul.f32.gmra.mxu0 %v706
    %v866 = vpop.f32.mrf.mxu0
    %v867 = vadd.f32 %v523, %v866
    %868 = vmatmul.f32.gmra.mxu0 %v709
    %v869 = vpop.f32.mrf.mxu0
    %v870 = vadd.f32 %v528, %v869
    %871 = vmatmul.f32.gmra.mxu0 %v712
    %v872 = vpop.f32.mrf.mxu0
    %v873 = vadd.f32 %v533, %v872
    %874 = vmatmul.f32.gmra.mxu0 %v715
    %v875 = vpop.f32.mrf.mxu0
    %v876 = vadd.f32 %v538, %v875
    %877 = vmatmul.f32.gmra.mxu0 %v718
    %v878 = vpop.f32.mrf.mxu0
    %v879 = vadd.f32 %v543, %v878
    %880 = vmatmul.f32.gmra.mxu0 %v721
    %v881 = vpop.f32.mrf.mxu0
    %v882 = vadd.f32 %v548, %v881
    %883 = vmatmul.f32.gmra.mxu0 %v724
    %v884 = vpop.f32.mrf.mxu0
    %v885 = vadd.f32 %v553, %v884
    %886 = vmatmul.f32.gmra.mxu0 %v727
    %v887 = vpop.f32.mrf.mxu0
    %v888 = vadd.f32 %v558, %v887
    %889 = vmatmul.f32.gmra.mxu0 %v730
    %v890 = vpop.f32.mrf.mxu0
    %v891 = vadd.f32 %v563, %v890
    %892 = vmatmul.f32.gmra.mxu0 %v733
    %v893 = vpop.f32.mrf.mxu0
    %v894 = vadd.f32 %v568, %v893
    %895 = vmatmul.f32.gmra.mxu0 %v736
    %v896 = vpop.f32.mrf.mxu0
    %v897 = vadd.f32 %v573, %v896
    %898 = vmatmul.f32.gmra.mxu0 %v739
    %v899 = vpop.f32.mrf.mxu0
    %v900 = vadd.f32 %v578, %v899
    %901 = vmatmul.f32.gmra.mxu0 %v742
    %v902 = vpop.f32.mrf.mxu0
    %v903 = vadd.f32 %v583, %v902
    %904 = vmatmul.f32.gmra.mxu0 %v745
    %v905 = vpop.f32.mrf.mxu0
    %v906 = vadd.f32 %v588, %v905
    %907 = vmatmul.f32.gmra.mxu0 %v748
    %v908 = vpop.f32.mrf.mxu0
    %v909 = vadd.f32 %v593, %v908
    %910 = vmatmul.f32.gmra.mxu0 %v751
    %v911 = vpop.f32.mrf.mxu0
    %v912 = vadd.f32 %v598, %v911
    %913 = vmatmul.f32.gmra.mxu0 %v754
    %v914 = vpop.f32.mrf.mxu0
    %v915 = vadd.f32 %v603, %v914
    %916 = vmatmul.f32.gmra.mxu0 %v757
    %v917 = vpop.f32.mrf.mxu0
    %v918 = vadd.f32 %v608, %v917
    %919 = vmatmul.f32.gmra.mxu0 %v760
    %v920 = vpop.f32.mrf.mxu0
    %v921 = vadd.f32 %v613, %v920
    %922 = vmatmul.f32.gmra.mxu0 %v763
    %v923 = vpop.f32.mrf.mxu0
    %v924 = vadd.f32 %v618, %v923
    %925 = vdwg.mxu0
    %v926 = vperm.slane %v44, 0
    %v927 = vmul.f32 %v926, %v783
    %v928 = vmul.f32 %v926, %v786
    %v929 = vmul.f32 %v926, %v789
    %v930 = vmul.f32 %v926, %v792
    %v931 = vadd.f32 %v237, %v927
    %v932 = vadd.f32 %v240, %v928
    %v933 = vadd.f32 %v243, %v929
    %v934 = vadd.f32 %v246, %v930
    %v935 = vperm.slane %v44, 1
    %v936 = vmul.f32 %v935, %v795
    %v937 = vmul.f32 %v935, %v798
    %v938 = vmul.f32 %v935, %v801
    %v939 = vmul.f32 %v935, %v804
    %v940 = vadd.f32 %v931, %v936
    %v941 = vadd.f32 %v932, %v937
    %v942 = vadd.f32 %v933, %v938
    %v943 = vadd.f32 %v934, %v939
    %v944 = vperm.slane %v44, 2
    %v945 = vmul.f32 %v944, %v807
    %v946 = vmul.f32 %v944, %v810
    %v947 = vmul.f32 %v944, %v813
    %v948 = vmul.f32 %v944, %v816
    %v949 = vadd.f32 %v940, %v945
    %v950 = vadd.f32 %v941, %v946
    %v951 = vadd.f32 %v942, %v947
    %v952 = vadd.f32 %v943, %v948
    %v953 = vperm.slane %v44, 3
    %v954 = vmul.f32 %v953, %v819
    %v955 = vmul.f32 %v953, %v822
    %v956 = vmul.f32 %v953, %v825
    %v957 = vmul.f32 %v953, %v828
    %v958 = vadd.f32 %v949, %v954
    %v959 = vadd.f32 %v950, %v955
    %v960 = vadd.f32 %v951, %v956
    %v961 = vadd.f32 %v952, %v957
    %v962 = vperm.slane %v44, 4
    %v963 = vmul.f32 %v962, %v831
    %v964 = vmul.f32 %v962, %v834
    %v965 = vmul.f32 %v962, %v837
    %v966 = vmul.f32 %v962, %v840
    %v967 = vadd.f32 %v958, %v963
    %v968 = vadd.f32 %v959, %v964
    %v969 = vadd.f32 %v960, %v965
    %v970 = vadd.f32 %v961, %v966
    %v971 = vperm.slane %v44, 5
    %v972 = vmul.f32 %v971, %v843
    %v973 = vmul.f32 %v971, %v846
    %v974 = vmul.f32 %v971, %v849
    %v975 = vmul.f32 %v971, %v852
    %v976 = vadd.f32 %v967, %v972
    %v977 = vadd.f32 %v968, %v973
    %v978 = vadd.f32 %v969, %v974
    %v979 = vadd.f32 %v970, %v975
    %v980 = vperm.slane %v44, 6
    %v981 = vmul.f32 %v980, %v855
    %v982 = vmul.f32 %v980, %v858
    %v983 = vmul.f32 %v980, %v861
    %v984 = vmul.f32 %v980, %v864
    %v985 = vadd.f32 %v976, %v981
    %v986 = vadd.f32 %v977, %v982
    %v987 = vadd.f32 %v978, %v983
    %v988 = vadd.f32 %v979, %v984
    %v989 = vperm.slane %v44, 7
    %v990 = vmul.f32 %v989, %v867
    %v991 = vmul.f32 %v989, %v870
    %v992 = vmul.f32 %v989, %v873
    %v993 = vmul.f32 %v989, %v876
    %v994 = vadd.f32 %v985, %v990
    %v995 = vadd.f32 %v986, %v991
    %v996 = vadd.f32 %v987, %v992
    %v997 = vadd.f32 %v988, %v993
    %v998 = vperm.slane %v45, 0
    %v999 = vmul.f32 %v998, %v879
    %v1000 = vmul.f32 %v998, %v882
    %v1001 = vmul.f32 %v998, %v885
    %v1002 = vmul.f32 %v998, %v888
    %v1003 = vadd.f32 %v994, %v999
    %v1004 = vadd.f32 %v995, %v1000
    %v1005 = vadd.f32 %v996, %v1001
    %v1006 = vadd.f32 %v997, %v1002
    %v1007 = vperm.slane %v45, 1
    %v1008 = vmul.f32 %v1007, %v891
    %v1009 = vmul.f32 %v1007, %v894
    %v1010 = vmul.f32 %v1007, %v897
    %v1011 = vmul.f32 %v1007, %v900
    %v1012 = vadd.f32 %v1003, %v1008
    %v1013 = vadd.f32 %v1004, %v1009
    %v1014 = vadd.f32 %v1005, %v1010
    %v1015 = vadd.f32 %v1006, %v1011
    %v1016 = vperm.slane %v45, 2
    %v1017 = vmul.f32 %v1016, %v903
    %v1018 = vmul.f32 %v1016, %v906
    %v1019 = vmul.f32 %v1016, %v909
    %v1020 = vmul.f32 %v1016, %v912
    %v1021 = vadd.f32 %v1012, %v1017
    %v1022 = vadd.f32 %v1013, %v1018
    %v1023 = vadd.f32 %v1014, %v1019
    %v1024 = vadd.f32 %v1015, %v1020
    %v1025 = vperm.slane %v45, 3
    %v1026 = vmul.f32 %v1025, %v915
    %v1027 = vmul.f32 %v1025, %v918
    %v1028 = vmul.f32 %v1025, %v921
    %v1029 = vmul.f32 %v1025, %v924
    %v1030 = vadd.f32 %v1021, %v1026
    %v1031 = vadd.f32 %v1022, %v1027
    %v1032 = vadd.f32 %v1023, %v1028
    %v1033 = vadd.f32 %v1024, %v1029
    %v1034 = vmax.f32 %v1030, 0.0
    %v1035 = vmax.f32 %v1031, 0.0
    %v1036 = vmax.f32 %v1032, 0.0
    %v1037 = vmax.f32 %v1033, 0.0
    %v1038 = vld [vmem:[%s6] sm:$0xff]
    %v1039 = vld [vmem:[%s6 + $0x8] sm:$0xff]
    %v1040 = vld [vmem:[%s6 + $0x10] sm:$0xff]
    %v1041 = vld [vmem:[%s6 + $0x18] sm:$0xff]
    %v1042 = vld [vmem:[%s7] sm:$0xff]
    %v1043 = vld [vmem:[%s7 + $0x8] sm:$0xff]
    %v1044 = vld [vmem:[%s7 + $0x10] sm:$0xff]
    %v1045 = vld [vmem:[%s7 + $0x18] sm:$0xff]
    %1047 = vset.pattern.permute.xlu0 0
    %1048 = vperm.xlu0 %1047, %v1042
    %v1049 = vpop.permute.xlu0 %1048
    %1052 = vset.pattern.permute.xlu0 0
    %1053 = vperm.xlu0 %1052, %v1043
    %v1054 = vpop.permute.xlu0 %1053
    %1057 = vset.pattern.permute.xlu0 0
    %1058 = vperm.xlu0 %1057, %v1044
    %v1059 = vpop.permute.xlu0 %1058
    %1062 = vset.pattern.permute.xlu0 0
    %1063 = vperm.xlu0 %1062, %v1045
    %v1064 = vpop.permute.xlu0 %1063
    %v1067 = vsel %vm620, %v1038, 0
    %v1070 = vsel %vm620, %v1039, 0
    %v1073 = vsel %vm620, %v1040, 0
    %v1076 = vsel %vm620, %v1041, 0
    %1078 = vmatpush.msra.mxu0 0.0
    %1079 = vmatpush.msra.mxu0 0.0
    %1080 = vmatpush.msra.mxu0 0.0
    %1081 = vmatpush.msra.mxu0 0.0
    %1082 = vmatpush.msra.mxu0 0.0
    %1083 = vmatpush.msra.mxu0 0.0
    %1084 = vmatpush.msra.mxu0 0.0
    %1085 = vmatpush.msra.mxu0 0.0
    %1086 = vmatpush.msra.mxu0 0.0
    %1087 = vmatpush.msra.mxu0 0.0
    %1088 = vmatpush.msra.mxu0 0.0
    %1089 = vmatpush.msra.mxu0 0.0
    %1090 = vmatpush.msra.mxu0 %v279
    %1091 = vmatpush.msra.mxu0 %v278
    %1092 = vmatpush.msra.mxu0 %v277
    %1093 = vmatpush.msra.mxu0 %v276
    %1094 = vmatmul.f32.gmra.mxu0 %v1067
    %v1095 = vpop.f32.mrf.mxu0
    %v1096 = vadd.f32 %v1049, %v1095
    %1097 = vmatmul.f32.gmra.mxu0 %v1070
    %v1098 = vpop.f32.mrf.mxu0
    %v1099 = vadd.f32 %v1054, %v1098
    %1100 = vmatmul.f32.gmra.mxu0 %v1073
    %v1101 = vpop.f32.mrf.mxu0
    %v1102 = vadd.f32 %v1059, %v1101
    %1103 = vmatmul.f32.gmra.mxu0 %v1076
    %v1104 = vpop.f32.mrf.mxu0
    %v1105 = vadd.f32 %v1064, %v1104
    %1106 = vdwg.mxu0
    %v1107 = vmul.f32 %v1034, %v1096
    %v1108 = vmul.f32 %v1035, %v1099
    %v1109 = vmul.f32 %v1036, %v1102
    %v1110 = vmul.f32 %v1037, %v1105
    %v1111 = vadd.f32 %v1107, %v1108
    %v1112 = vadd.f32 %v1111, %v1109
    %v1113 = vadd.f32 %v1112, %v1110
    %v1114 = vrot.slane %v1113, 4
    %v1115 = vadd.f32 %v1113, %v1114
    %v1116 = vrot.slane %v1115, 2
    %v1117 = vadd.f32 %v1115, %v1116
    %v1118 = vrot.slane %v1117, 1
    %v1119 = vadd.f32 %v1117, %v1118
    %v1120 = vld [vmem:[%s8] sm:$0xff]
    %v1121 = vld [vmem:[%s8 + $0x8] sm:$0xff]
    %v1122 = vld [vmem:[%s8 + $0x10] sm:$0xff]
    %v1123 = vld [vmem:[%s8 + $0x18] sm:$0xff]
    %1125 = vset.pattern.permute.xlu0 0
    %1126 = vperm.xlu0 %1125, %v1120
    %v1127 = vpop.permute.xlu0 %1126
    %1130 = vset.pattern.permute.xlu0 0
    %1131 = vperm.xlu0 %1130, %v1121
    %v1132 = vpop.permute.xlu0 %1131
    %1135 = vset.pattern.permute.xlu0 0
    %1136 = vperm.xlu0 %1135, %v1122
    %v1137 = vpop.permute.xlu0 %1136
    %1140 = vset.pattern.permute.xlu0 0
    %1141 = vperm.xlu0 %1140, %v1123
    %v1142 = vpop.permute.xlu0 %1141
    %v1144 = vmul.f32 %v280, %v1127
    %v1145 = vmul.f32 %v281, %v1132
    %v1146 = vmul.f32 %v282, %v1137
    %v1147 = vmul.f32 %v283, %v1142
    %v1148 = vadd.f32 %v1144, %v1145
    %v1149 = vadd.f32 %v1148, %v1146
    %v1150 = vadd.f32 %v1149, %v1147
    %v1151 = vrot.slane %v1150, 4
    %v1152 = vadd.f32 %v1150, %v1151
    %v1153 = vrot.slane %v1152, 2
    %v1154 = vadd.f32 %v1152, %v1153
    %v1155 = vrot.slane %v1154, 1
    %v1156 = vadd.f32 %v1154, %v1155
    %v1157 = vld [vmem:[#allocation2] sm:$0x1]
    %1159 = vset.pattern.permute.xlu0 0
    %1160 = vperm.xlu0 %1159, %v1157
    %v1161 = vpop.permute.xlu0 %1160
    %v1163 = vperm.slane %v1161, 0
    %v1164 = vadd.f32 %v1156, %v1163
    %v1165 = vadd.f32 %v1119, %v1164
    %1166 = vst [vmem:[#allocation3] sm:$0x1] %v1165
    // Predicated region
    $region42: #{tpu_custom_call.1} parent=1 // pred_check
      _
    $region43: #{tpu_custom_call.1} parent=1 // pred_check_branch
      %1168 = sbr.rel (0) target = $region45
    $region44: #{tpu_custom_call.1} parent=1 // pred_region
      %1170 = vsyncadd [#allocation4], 0
      %s1172 = sshll.u32 [#allocation3], 4
      %s1173 = int_to_ptr.vmem [resolvable:$true] %s1172
      %s1174 = sshll.u32 %s10, 4
      %s1175 = int_to_ptr.hbm [resolvable:$true] %s1174
      %1177 = dma.vmem_to_hbm [thread:$0]  %s1173, 16, %s1175, [#allocation4]
    $region45: #{tpu_custom_call.1} parent=1 // pred_fallthru
      _
    // Predicated region
    $region46: #{tpu_custom_call.1} parent=1 // pred_check
      _
    $region47: #{tpu_custom_call.1} parent=1 // pred_check_branch
      %1179 = sbr.rel (0) target = $region49
    $region48: #{tpu_custom_call.1} parent=1 // pred_region
      %1181 = dma.done [#allocation4], 16
    $region49: #{tpu_custom_call.1} parent=1 // pred_fallthru
      _
    %1182 = vsyncpa [#allocation4], 1

</llo_original>
